<compile_context>
chip_gen: v5e
topology: v5e:2x2
jax: 0.10.0
libtpu: 0.0.40
codegen_flags: <defaults>
</compile_context>

<pallas_src>
import jax
import jax.numpy as jnp
from jax.experimental import pallas as pl
from jax.experimental.pallas import tpu as pltpu

HIDDEN = 100
IN_F = 1
OUT_F = 3
PAD = 128          # lane width for hidden activations
OUT_PAD = 8        # padded output lanes (>= OUT_F; last dim == full array dim)
MAX_TB = 1024      # upper bound on rows per batch tile
SPLIT_B = 512      # above this, force >= 2 balanced tiles (keeps both v7x TCs busy)


def _cdiv(a, b):
    return -(-a // b)


def _round_up(n, m):
    return ((n + m - 1) // m) * m


def _choose_tiling(batch):
    """Return (TB, Bp): near-equal tiles, TB multiple of 8, <= MAX_TB rows each.

    For batches above SPLIT_B the tile count is forced even so the "parallel"
    batch axis shards evenly across v7x's two TensorCores."""
    if batch <= SPLIT_B:
        n_tiles = 1
    else:
        n_tiles = max(2, _cdiv(batch, MAX_TB))
        if n_tiles % 2:
            n_tiles += 1
    tb = _round_up(_cdiv(batch, n_tiles), 8)
    return tb, tb * n_tiles


def _mlp_kernel(x_ref, w1_ref, b123_ref, w23_ref, w4_ref, b4_ref, o_ref):
    """One batch-tile of the full 4-layer MLP, entirely in VMEM."""
    x = x_ref[...]                                   # (TB, 1)
    b = b123_ref[...]                                # (3, 128)
    # Layer 1 has K=1: a broadcast multiply on the VPU beats a padded MXU pass.
    h = jnp.tanh(x * w1_ref[...] + b[0:1, :])        # (TB,1)*(1,128) -> (TB,128)
    h = jnp.tanh(jnp.dot(h, w23_ref[0],
                         preferred_element_type=jnp.float32) + b[1:2, :])
    h = jnp.tanh(jnp.dot(h, w23_ref[1],
                         preferred_element_type=jnp.float32) + b[2:3, :])
    o_ref[...] = jnp.dot(h, w4_ref[...],
                         preferred_element_type=jnp.float32) + b4_ref[...]


def _pad2d(a, rows, cols):
    r, c = a.shape
    return jnp.pad(a, ((0, rows - r), (0, cols - c)))


def _pad1d(a, n):
    return jnp.pad(a, (0, n - a.shape[0]))


def prepare_params(params):
    """Zero-pad / pack weights & biases ONCE, outside the hot path.

    Returns (w1p, b123, w23, w4p, b4p) with shapes
      w1p: (1, 128), b123: (3, 128), w23: (2, 128, 128),
      w4p: (128, 8), b4p: (1, 8).
    """
    (w1, b1), (w2, b2), (w3, b3), (w4, b4) = params
    w1p = _pad2d(w1, 1, PAD)                                            # (1, 128)
    b123 = jnp.stack([_pad1d(b1, PAD), _pad1d(b2, PAD), _pad1d(b3, PAD)])  # (3, 128)
    w23 = jnp.stack([_pad2d(w2, PAD, PAD), _pad2d(w3, PAD, PAD)])          # (2,128,128)
    w4p = _pad2d(w4, PAD, OUT_PAD)                                      # (128, 8)
    b4p = _pad1d(b4, OUT_PAD)[None, :]                                  # (1, 8)
    return (w1p, b123, w23, w4p, b4p)


@jax.jit
def neural_net_multi_output(x, padded_params):
    """x: (B, 1) float32, padded_params from prepare_params() -> (B, 3) float32."""
    w1p, b123, w23, w4p, b4p = padded_params
    B = x.shape[0]
    TB, Bp = _choose_tiling(B)
    grid = (Bp // TB,)

    xp = jnp.pad(x, ((0, Bp - B), (0, 0)))            # (Bp, 1) -- no lane padding

    x_spec    = pl.BlockSpec((TB, IN_F), lambda i: (i, 0))
    w1_spec   = pl.BlockSpec((1, PAD), lambda i: (0, 0))
    b123_spec = pl.BlockSpec((3, PAD), lambda i: (0, 0))
    w23_spec  = pl.BlockSpec((2, PAD, PAD), lambda i: (0, 0, 0))
    w4_spec   = pl.BlockSpec((PAD, OUT_PAD), lambda i: (0, 0))
    b4_spec   = pl.BlockSpec((1, OUT_PAD), lambda i: (0, 0))
    out_spec  = pl.BlockSpec((TB, OUT_PAD), lambda i: (i, 0))

    flops = 2 * Bp * (PAD + 2 * PAD * PAD + PAD * OUT_PAD)
    transcendentals = 3 * Bp * PAD
    bytes_accessed = 4 * (Bp * IN_F + Bp * OUT_PAD            # input + (narrow) output
                          + PAD + 3 * PAD                      # w1 + b1..b3
                          + 2 * PAD * PAD                      # w2, w3
                          + PAD * OUT_PAD + OUT_PAD)           # w4, b4

    out = pl.pallas_call(
        _mlp_kernel,
        out_shape=jax.ShapeDtypeStruct((Bp, OUT_PAD), jnp.float32),
        grid_spec=pltpu.PrefetchScalarGridSpec(
            num_scalar_prefetch=0,
            grid=grid,
            in_specs=[x_spec, w1_spec, b123_spec, w23_spec, w4_spec, b4_spec],
            out_specs=out_spec,
        ),
        compiler_params=pltpu.CompilerParams(
            dimension_semantics=("parallel",)),
        cost_estimate=pl.CostEstimate(
            flops=flops,
            transcendentals=transcendentals,
            bytes_accessed=bytes_accessed),
    )(xp, w1p, b123, w23, w4p, b4p)

    return out[:B, :OUT_F]


def init_params(key):
    """Deterministic params matching nn.Linear default init:
    U(-1/sqrt(fan_in), 1/sqrt(fan_in)) for both weight and bias.
    Weights stored as (in_features, out_features)."""
    dims = [(IN_F, HIDDEN), (HIDDEN, HIDDEN), (HIDDEN, HIDDEN), (HIDDEN, OUT_F)]
    params = []
    for (fan_in, fan_out) in dims:
        key, kw, kb = jax.random.split(key, 3)
        bound = 1.0 / jnp.sqrt(float(fan_in))
        w = jax.random.uniform(kw, (fan_in, fan_out), jnp.float32, -bound, bound)
        b = jax.random.uniform(kb, (fan_out,), jnp.float32, -bound, bound)
        params.append((w, b))
    return params


def _reference(x, params):
    h = x
    for i, (w, b) in enumerate(params):
        h = h @ w + b
        if i < len(params) - 1:
            h = jnp.tanh(h)
    return h


if __name__ == "__main__":
    key = jax.random.PRNGKey(0)
    params = init_params(key)
    padded = prepare_params(params)          # padded/packed once, outside the hot path

    # Small batch (single-tile path): the module maps R^1 -> R^3.
    x_small = jax.random.normal(jax.random.PRNGKey(1), (8, 1), jnp.float32)
    y_small = jax.block_until_ready(neural_net_multi_output(x_small, padded))
    y_small_ref = _reference(x_small, params)
    assert y_small.shape == (8, 3), y_small.shape
    assert jnp.allclose(y_small, y_small_ref, atol=1e-5, rtol=1e-5), \
        float(jnp.max(jnp.abs(y_small - y_small_ref)))

    # Moderate batch (two balanced tiles + batch padding path: TB=304, Bp=608).
    x_big = jax.random.normal(jax.random.PRNGKey(2), (600, 1), jnp.float32)
    y_big = jax.block_until_ready(neural_net_multi_output(x_big, padded))
    y_big_ref = _reference(x_big, params)
    assert y_big.shape == (600, 3), y_big.shape
    assert jnp.allclose(y_big, y_big_ref, atol=1e-5, rtol=1e-5), \
        float(jnp.max(jnp.abs(y_big - y_big_ref)))

    print("KERNEL_OK")
</pallas_src>

<mosaic_0001>
module attributes {stable_mosaic.version = 11 : i64} {
  func.func @_mlp_kernel(%arg0: i32, %arg1: memref<8x1xf32, #tpu.memory_space<vmem>>, %arg2: memref<1x128xf32, #tpu.memory_space<vmem>>, %arg3: memref<3x128xf32, #tpu.memory_space<vmem>>, %arg4: memref<2x128x128xf32, #tpu.memory_space<vmem>>, %arg5: memref<128x8xf32, #tpu.memory_space<vmem>>, %arg6: memref<1x8xf32, #tpu.memory_space<vmem>>, %arg7: memref<8x8xf32, #tpu.memory_space<vmem>>) attributes {dimension_semantics = [#tpu.dimension_semantics<parallel>], iteration_bounds = array<i64: 1>, scalar_prefetch = 0 : i64, scratch_operands = 0 : i64, tpu.core_type = #tpu.core_type<tc>, window_params = [{transform_indices = @transform_0, window_bounds = array<i64: 8, 1>}, {pipeline_mode = #tpu.pipeline_mode<synchronous>, transform_indices = @transform_1, window_bounds = array<i64: 1, 128>}, {pipeline_mode = #tpu.pipeline_mode<synchronous>, transform_indices = @transform_2, window_bounds = array<i64: 3, 128>}, {pipeline_mode = #tpu.pipeline_mode<synchronous>, transform_indices = @transform_3, window_bounds = array<i64: 2, 128, 128>}, {pipeline_mode = #tpu.pipeline_mode<synchronous>, transform_indices = @transform_4, window_bounds = array<i64: 128, 8>}, {pipeline_mode = #tpu.pipeline_mode<synchronous>, transform_indices = @transform_5, window_bounds = array<i64: 1, 8>}, {transform_indices = @transform_6, window_bounds = array<i64: 8, 8>}]} {
    %c0 = arith.constant 0 : index
    %c0_0 = arith.constant 0 : index
    %0 = vector.load %arg1[%c0, %c0_0] : memref<8x1xf32, #tpu.memory_space<vmem>>, vector<8x1xf32>
    %c0_1 = arith.constant 0 : index
    %c0_2 = arith.constant 0 : index
    %1 = vector.load %arg3[%c0_1, %c0_2] : memref<3x128xf32, #tpu.memory_space<vmem>>, vector<3x128xf32>
    %c0_3 = arith.constant 0 : index
    %c0_4 = arith.constant 0 : index
    %2 = vector.load %arg2[%c0_3, %c0_4] : memref<1x128xf32, #tpu.memory_space<vmem>>, vector<1x128xf32>
    %3 = vector.broadcast %0 : vector<8x1xf32> to vector<8x128xf32>
    %4 = vector.broadcast %2 : vector<1x128xf32> to vector<8x128xf32>
    %5 = arith.mulf %3, %4 : vector<8x128xf32>
    %6 = vector.extract_strided_slice %1 {offsets = [0, 0], sizes = [1, 128], strides = [1, 1]} : vector<3x128xf32> to vector<1x128xf32>
    %7 = vector.broadcast %6 : vector<1x128xf32> to vector<8x128xf32>
    %8 = arith.addf %5, %7 : vector<8x128xf32>
    %9 = math.tanh %8 : vector<8x128xf32>
    %c0_5 = arith.constant 0 : index
    %c0_6 = arith.constant 0 : index
    %c0_7 = arith.constant 0 : index
    %10 = vector.load %arg4[%c0_5, %c0_6, %c0_7] : memref<2x128x128xf32, #tpu.memory_space<vmem>>, vector<1x128x128xf32>
    %11 = vector.shape_cast %10 : vector<1x128x128xf32> to vector<128x128xf32>
    %cst = arith.constant dense<0.000000e+00> : vector<8x128xf32>
    %12 = tpu.matmul %9, %11, %cst {dimension_numbers = #tpu.dot_dimension_numbers<[1], [0], [0], [1], [0, 0, 1, 1], [], []>} : vector<8x128xf32>, vector<128x128xf32>, vector<8x128xf32> -> vector<8x128xf32>
    %13 = vector.extract_strided_slice %1 {offsets = [1, 0], sizes = [1, 128], strides = [1, 1]} : vector<3x128xf32> to vector<1x128xf32>
    %14 = vector.broadcast %13 : vector<1x128xf32> to vector<8x128xf32>
    %15 = arith.addf %12, %14 : vector<8x128xf32>
    %16 = math.tanh %15 : vector<8x128xf32>
    %c1 = arith.constant 1 : index
    %c0_8 = arith.constant 0 : index
    %c0_9 = arith.constant 0 : index
    %17 = vector.load %arg4[%c1, %c0_8, %c0_9] : memref<2x128x128xf32, #tpu.memory_space<vmem>>, vector<1x128x128xf32>
    %18 = vector.shape_cast %17 : vector<1x128x128xf32> to vector<128x128xf32>
    %cst_10 = arith.constant dense<0.000000e+00> : vector<8x128xf32>
    %19 = tpu.matmul %16, %18, %cst_10 {dimension_numbers = #tpu.dot_dimension_numbers<[1], [0], [0], [1], [0, 0, 1, 1], [], []>} : vector<8x128xf32>, vector<128x128xf32>, vector<8x128xf32> -> vector<8x128xf32>
    %20 = vector.extract_strided_slice %1 {offsets = [2, 0], sizes = [1, 128], strides = [1, 1]} : vector<3x128xf32> to vector<1x128xf32>
    %21 = vector.broadcast %20 : vector<1x128xf32> to vector<8x128xf32>
    %22 = arith.addf %19, %21 : vector<8x128xf32>
    %23 = math.tanh %22 : vector<8x128xf32>
    %c0_11 = arith.constant 0 : index
    %c0_12 = arith.constant 0 : index
    %24 = vector.load %arg5[%c0_11, %c0_12] : memref<128x8xf32, #tpu.memory_space<vmem>>, vector<128x8xf32>
    %cst_13 = arith.constant dense<0.000000e+00> : vector<8x8xf32>
    %25 = tpu.matmul %23, %24, %cst_13 {dimension_numbers = #tpu.dot_dimension_numbers<[1], [0], [0], [1], [0, 0, 1, 1], [], []>} : vector<8x128xf32>, vector<128x8xf32>, vector<8x8xf32> -> vector<8x8xf32>
    %c0_14 = arith.constant 0 : index
    %c0_15 = arith.constant 0 : index
    %26 = vector.load %arg6[%c0_14, %c0_15] : memref<1x8xf32, #tpu.memory_space<vmem>>, vector<1x8xf32>
    %27 = vector.broadcast %26 : vector<1x8xf32> to vector<8x8xf32>
    %28 = arith.addf %25, %27 : vector<8x8xf32>
    %c0_16 = arith.constant 0 : index
    %c0_17 = arith.constant 0 : index
    %29 = vector.load %arg7[%c0_16, %c0_17] : memref<8x8xf32, #tpu.memory_space<vmem>>, vector<8x8xf32>
    tpu.vector_store %arg7[%c0_16, %c0_17], %28 {strides = array<i32>} : memref<8x8xf32, #tpu.memory_space<vmem>>, vector<8x8xf32>,
    return
  }
  func.func @transform_0(%arg0: i32) -> (i32, i32) {
    %c0_i32 = arith.constant 0 : i32
    %c0_i32_0 = arith.constant 0 : i32
    return %arg0, %c0_i32 : i32, i32
  }
  func.func @transform_1(%arg0: i32) -> (i32, i32) {
    %c0_i32 = arith.constant 0 : i32
    %c0_i32_0 = arith.constant 0 : i32
    %c0_i32_1 = arith.constant 0 : i32
    return %c0_i32, %c0_i32_0 : i32, i32
  }
  func.func @transform_2(%arg0: i32) -> (i32, i32) {
    %c0_i32 = arith.constant 0 : i32
    %c0_i32_0 = arith.constant 0 : i32
    %c0_i32_1 = arith.constant 0 : i32
    return %c0_i32, %c0_i32_0 : i32, i32
  }
  func.func @transform_3(%arg0: i32) -> (i32, i32, i32) {
    %c0_i32 = arith.constant 0 : i32
    %c0_i32_0 = arith.constant 0 : i32
    %c0_i32_1 = arith.constant 0 : i32
    %c0_i32_2 = arith.constant 0 : i32
    return %c0_i32, %c0_i32_0, %c0_i32_1 : i32, i32, i32
  }
  func.func @transform_4(%arg0: i32) -> (i32, i32) {
    %c0_i32 = arith.constant 0 : i32
    %c0_i32_0 = arith.constant 0 : i32
    %c0_i32_1 = arith.constant 0 : i32
    return %c0_i32, %c0_i32_0 : i32, i32
  }
  func.func @transform_5(%arg0: i32) -> (i32, i32) {
    %c0_i32 = arith.constant 0 : i32
    %c0_i32_0 = arith.constant 0 : i32
    %c0_i32_1 = arith.constant 0 : i32
    return %c0_i32, %c0_i32_0 : i32, i32
  }
  func.func @transform_6(%arg0: i32) -> (i32, i32) {
    %c0_i32 = arith.constant 0 : i32
    %c0_i32_0 = arith.constant 0 : i32
    return %arg0, %c0_i32 : i32, i32
  }
}

</mosaic_0001>

<llo_original>
// kernel: neural_net_multi_output.1
$region0: #{neural_net_multi_output.1}
  #allocation0 [shape = 'u32[]', space=smem, size = 0x4, offset = 0x4, fixed_abs, tag = 'smem constant byte address 0x4 - core index']
  #allocation1 [shape = 'u32[72,128]{1,0:T(1,128)}', space=vmem, size = 0x9000, scoped, tag = 'internal scratch']
  %s0 = inlined_call_operand.vmem [shape: f32[8,1], index: 0, kind: input, shape index: {}]
  %s1 = inlined_call_operand.vmem [shape: f32[1,128], index: 1, kind: input, shape index: {}]
  %s2 = inlined_call_operand.vmem [shape: f32[3,128], index: 2, kind: input, shape index: {}]
  %s3 = inlined_call_operand.hbm [shape: f32[2,128,128], index: 3, kind: input, shape index: {}]
  %s4 = inlined_call_operand.vmem [shape: f32[128,8], index: 4, kind: input, shape index: {}]
  %s5 = inlined_call_operand.vmem [shape: f32[1,8], index: 5, kind: input, shape index: {}]
  %s6 = inlined_call_operand.vmem [shape: f32[8,8], index: 6, kind: output, shape index: {}]
  %s7 = sld [smem:[#allocation0]]
  $region38: #{neural_net_multi_output.1} parent=0
    _
  %s9 = ssub.s32 1, %s7
  %s10 = scalar_select 0, %s9, %s7
  $region1: #{neural_net_multi_output.1} parent=0
    #allocation2 [shape = 'u8[131072]{0}', space=vmem, size = 0x20000, scoped, tag = 'input window, operand 3, single buffered']
    #allocation3 [shape = 's32[1]{0}', space=sflag, size = 0x4, scoped, tag = 'scoped memory for neural_net_multi_output.1']
    %11 = vsyncpa [#allocation3], 0
    // Predicated region
    $region2: #{neural_net_multi_output.1} parent=1 // pred_check
      _
    $region3: #{neural_net_multi_output.1} parent=1 // pred_check_branch
      %13 = sbr.rel (0) target = $region5
    $region4: #{neural_net_multi_output.1} parent=1 // pred_region
      _
    $region5: #{neural_net_multi_output.1} parent=1 // pred_fallthru
      _
    // Predicated region
    $region6: #{neural_net_multi_output.1} parent=1 // pred_check
      _
    $region7: #{neural_net_multi_output.1} parent=1 // pred_check_branch
      %15 = sbr.rel (0) target = $region9
    $region8: #{neural_net_multi_output.1} parent=1 // pred_region
      _
    $region9: #{neural_net_multi_output.1} parent=1 // pred_fallthru
      _
    // Predicated region
    $region10: #{neural_net_multi_output.1} parent=1 // pred_check
      _
    $region11: #{neural_net_multi_output.1} parent=1 // pred_check_branch
      %17 = sbr.rel (0) target = $region13
    $region12: #{neural_net_multi_output.1} parent=1 // pred_region
      _
    $region13: #{neural_net_multi_output.1} parent=1 // pred_fallthru
      _
    // Predicated region
    $region14: #{neural_net_multi_output.1} parent=1 // pred_check
      _
    $region15: #{neural_net_multi_output.1} parent=1 // pred_check_branch
      %19 = sbr.rel (0) target = $region17
    $region16: #{neural_net_multi_output.1} parent=1 // pred_region
      %21 = vsyncadd [#allocation3], 0
      %s22 = sshll.u32 %s3, 4
      %s23 = int_to_ptr.hbm [resolvable:$true] %s22
      %s24 = sshll.u32 [#allocation2], 4
      %s25 = int_to_ptr.vmem [resolvable:$true] %s24
      %30 = dma.hbm_to_vmem [thread:$0]  %s23, 4096, %s25, [#allocation3], 128, 128, 8
    $region17: #{neural_net_multi_output.1} parent=1 // pred_fallthru
      _
    // Predicated region
    $region18: #{neural_net_multi_output.1} parent=1 // pred_check
      _
    $region19: #{neural_net_multi_output.1} parent=1 // pred_check_branch
      %32 = sbr.rel (0) target = $region21
    $region20: #{neural_net_multi_output.1} parent=1 // pred_region
      _
    $region21: #{neural_net_multi_output.1} parent=1 // pred_fallthru
      _
    // Predicated region
    $region22: #{neural_net_multi_output.1} parent=1 // pred_check
      _
    $region23: #{neural_net_multi_output.1} parent=1 // pred_check_branch
      %34 = sbr.rel (0) target = $region25
    $region24: #{neural_net_multi_output.1} parent=1 // pred_region
      _
    $region25: #{neural_net_multi_output.1} parent=1 // pred_fallthru
      _
    // Predicated region
    $region26: #{neural_net_multi_output.1} parent=1 // pred_check
      _
    $region27: #{neural_net_multi_output.1} parent=1 // pred_check_branch
      %36 = sbr.rel (0) target = $region29
    $region28: #{neural_net_multi_output.1} parent=1 // pred_region
      %38 = dma.done [#allocation3], 4096
    $region29: #{neural_net_multi_output.1} parent=1 // pred_fallthru
      _
    %v39 = vld [vmem:[%s0] sm:$0xff]
    %v40 = vld [vmem:[%s2] sm:$0x7]
    %v41 = vld [vmem:[%s1] sm:$0x1]
    %43 = vset.pattern.permute.xlu0 0
    %44 = vperm.xlu0 %43, %v39
    %v45 = vpop.permute.xlu0 %44
    %v48 = vperm.slane %v41, 0
    %v50 = vmul.f32 %v45, %v48
    %v51 = vperm.slane %v40, 0
    %v52 = vadd.f32 %v50, %v51
    %v53 = vtanh.pop %v52
    %v54 = vld [vmem:[#allocation2] sm:$0xff]
    %v55 = vld [vmem:[#allocation2 + $0x8] sm:$0xff]
    %v56 = vld [vmem:[#allocation2 + $0x10] sm:$0xff]
    %v57 = vld [vmem:[#allocation2 + $0x18] sm:$0xff]
    %v58 = vld [vmem:[#allocation2 + $0x20] sm:$0xff]
    %v59 = vld [vmem:[#allocation2 + $0x28] sm:$0xff]
    %v60 = vld [vmem:[#allocation2 + $0x30] sm:$0xff]
    %v61 = vld [vmem:[#allocation2 + $0x38] sm:$0xff]
    %v62 = vld [vmem:[#allocation2 + $0x40] sm:$0xff]
    %v63 = vld [vmem:[#allocation2 + $0x48] sm:$0xff]
    %v64 = vld [vmem:[#allocation2 + $0x50] sm:$0xff]
    %v65 = vld [vmem:[#allocation2 + $0x58] sm:$0xff]
    %v66 = vld [vmem:[#allocation2 + $0x60] sm:$0xff]
    %v67 = vld [vmem:[#allocation2 + $0x68] sm:$0xff]
    %v68 = vld [vmem:[#allocation2 + $0x70] sm:$0xff]
    %v69 = vld [vmem:[#allocation2 + $0x78] sm:$0xff]
    %v70 = vperm.slane %v40, 1
    %71 = vmatpush.msra.mxu0 %v69
    %72 = vmatpush.msra.mxu0 %v68
    %73 = vmatpush.msra.mxu0 %v67
    %74 = vmatpush.msra.mxu0 %v66
    %75 = vmatpush.msra.mxu0 %v65
    %76 = vmatpush.msra.mxu0 %v64
    %77 = vmatpush.msra.mxu0 %v63
    %78 = vmatpush.msra.mxu0 %v62
    %79 = vmatpush.msra.mxu0 %v61
    %80 = vmatpush.msra.mxu0 %v60
    %81 = vmatpush.msra.mxu0 %v59
    %82 = vmatpush.msra.mxu0 %v58
    %83 = vmatpush.msra.mxu0 %v57
    %84 = vmatpush.msra.mxu0 %v56
    %85 = vmatpush.msra.mxu0 %v55
    %86 = vmatpush.msra.mxu0 %v54
    %87 = vmatmul.f32.gmra.mxu0 %v53
    %v88 = vpop.f32.mrf.mxu0
    %v89 = vadd.f32 %v70, %v88
    %90 = vdwg.mxu0
    %v91 = vtanh.pop %v89
    %s92 = scalar_lea.vmem [#allocation2], 128
    %v93 = vld [vmem:[%s92] sm:$0xff]
    %v94 = vld [vmem:[%s92 + $0x8] sm:$0xff]
    %v95 = vld [vmem:[%s92 + $0x10] sm:$0xff]
    %v96 = vld [vmem:[%s92 + $0x18] sm:$0xff]
    %v97 = vld [vmem:[%s92 + $0x20] sm:$0xff]
    %v98 = vld [vmem:[%s92 + $0x28] sm:$0xff]
    %v99 = vld [vmem:[%s92 + $0x30] sm:$0xff]
    %v100 = vld [vmem:[%s92 + $0x38] sm:$0xff]
    %v101 = vld [vmem:[%s92 + $0x40] sm:$0xff]
    %v102 = vld [vmem:[%s92 + $0x48] sm:$0xff]
    %v103 = vld [vmem:[%s92 + $0x50] sm:$0xff]
    %v104 = vld [vmem:[%s92 + $0x58] sm:$0xff]
    %v105 = vld [vmem:[%s92 + $0x60] sm:$0xff]
    %v106 = vld [vmem:[%s92 + $0x68] sm:$0xff]
    %v107 = vld [vmem:[%s92 + $0x70] sm:$0xff]
    %v108 = vld [vmem:[%s92 + $0x78] sm:$0xff]
    %v109 = vperm.slane %v40, 2
    %110 = vmatpush.msra.mxu0 %v108
    %111 = vmatpush.msra.mxu0 %v107
    %112 = vmatpush.msra.mxu0 %v106
    %113 = vmatpush.msra.mxu0 %v105
    %114 = vmatpush.msra.mxu0 %v104
    %115 = vmatpush.msra.mxu0 %v103
    %116 = vmatpush.msra.mxu0 %v102
    %117 = vmatpush.msra.mxu0 %v101
    %118 = vmatpush.msra.mxu0 %v100
    %119 = vmatpush.msra.mxu0 %v99
    %120 = vmatpush.msra.mxu0 %v98
    %121 = vmatpush.msra.mxu0 %v97
    %122 = vmatpush.msra.mxu0 %v96
    %123 = vmatpush.msra.mxu0 %v95
    %124 = vmatpush.msra.mxu0 %v94
    %125 = vmatpush.msra.mxu0 %v93
    %126 = vmatmul.f32.gmra.mxu0 %v91
    %v127 = vpop.f32.mrf.mxu0
    %v128 = vadd.f32 %v109, %v127
    %129 = vdwg.mxu0
    %v130 = vtanh.pop %v128
    %v131 = vld [vmem:[%s4] sm:$0xff]
    %v132 = vld [vmem:[%s4 + $0x8] sm:$0xff]
    %v133 = vld [vmem:[%s4 + $0x10] sm:$0xff]
    %v134 = vld [vmem:[%s4 + $0x18] sm:$0xff]
    %v135 = vld [vmem:[%s4 + $0x20] sm:$0xff]
    %v136 = vld [vmem:[%s4 + $0x28] sm:$0xff]
    %v137 = vld [vmem:[%s4 + $0x30] sm:$0xff]
    %v138 = vld [vmem:[%s4 + $0x38] sm:$0xff]
    %v139 = vld [vmem:[%s4 + $0x40] sm:$0xff]
    %v140 = vld [vmem:[%s4 + $0x48] sm:$0xff]
    %v141 = vld [vmem:[%s4 + $0x50] sm:$0xff]
    %v142 = vld [vmem:[%s4 + $0x58] sm:$0xff]
    %v143 = vld [vmem:[%s4 + $0x60] sm:$0xff]
    %v144 = vld [vmem:[%s4 + $0x68] sm:$0xff]
    %v145 = vld [vmem:[%s4 + $0x70] sm:$0xff]
    %v146 = vld [vmem:[%s4 + $0x78] sm:$0xff]
    %v147 = vld [vmem:[%s5] sm:$0x1]
    %v149 = vperm.slane %v147, 0
    %151 = vmatpush.msra.mxu0 %v146
    %152 = vmatpush.msra.mxu0 %v145
    %153 = vmatpush.msra.mxu0 %v144
    %154 = vmatpush.msra.mxu0 %v143
    %155 = vmatpush.msra.mxu0 %v142
    %156 = vmatpush.msra.mxu0 %v141
    %157 = vmatpush.msra.mxu0 %v140
    %158 = vmatpush.msra.mxu0 %v139
    %159 = vmatpush.msra.mxu0 %v138
    %160 = vmatpush.msra.mxu0 %v137
    %161 = vmatpush.msra.mxu0 %v136
    %162 = vmatpush.msra.mxu0 %v135
    %163 = vmatpush.msra.mxu0 %v134
    %164 = vmatpush.msra.mxu0 %v133
    %165 = vmatpush.msra.mxu0 %v132
    %166 = vmatpush.msra.mxu0 %v131
    %167 = vmatmul.f32.gmra.mxu0 %v130
    %v168 = vpop.f32.mrf.mxu0
    %v169 = vadd.f32 %v149, %v168
    %170 = vdwg.mxu0
    %vm171 = vcmask 64512
    %172 = vst.msk [vmem:[%s6] sm:$0xff] %vm171, %v169
    // Predicated region
    $region30: #{neural_net_multi_output.1} parent=1 // pred_check
      _
    $region31: #{neural_net_multi_output.1} parent=1 // pred_check_branch
      %174 = sbr.rel (0) target = $region33
    $region32: #{neural_net_multi_output.1} parent=1 // pred_region
      _
    $region33: #{neural_net_multi_output.1} parent=1 // pred_fallthru
      _
    // Predicated region
    $region34: #{neural_net_multi_output.1} parent=1 // pred_check
      _
    $region35: #{neural_net_multi_output.1} parent=1 // pred_check_branch
      %176 = sbr.rel (0) target = $region37
    $region36: #{neural_net_multi_output.1} parent=1 // pred_region
      _
    $region37: #{neural_net_multi_output.1} parent=1 // pred_fallthru
      _
    %177 = vsyncpa [#allocation3], 1

</llo_original>
